<compile_context>
chip_gen: v6e
topology: v6e:2x2x1
jax: 0.10.0
libtpu: 0.0.40
codegen_flags: <defaults>
</compile_context>

<pallas_src>
import jax
import jax.numpy as jnp
from jax.experimental import pallas as pl
from jax.experimental.pallas import tpu as pltpu

COLS = 512      # lane-axis width of the 2-D sample slab (multiple of 128)
MAX_BR = 1024   # max block rows per grid step (multiple of 32 for the int8 code tile)
CHUNK = 256     # in-kernel row-chunk size (bounds elementwise temporaries ~0.5 MiB)


def _make_kernel(br):
    """Build the per-block kernel for a static block-row count `br`."""
    if br >= 2 * CHUNK and br % CHUNK == 0:
        nchunks, crows = br // CHUNK, CHUNK
    else:
        nchunks, crows = 1, br

    def kernel(code_ref, pred_ref, tgt_ref, out_ref):
        def chunk_sums(r0):
            # int8 code: 0 = drop, 1 = regression, 2 = classification (upcast is
            # free VPU filler under the DMA).
            code = code_ref[pl.ds(r0, crows), :].astype(jnp.int32)
            x = pred_ref[pl.ds(r0, crows), :]
            y = tgt_ref[pl.ds(r0, crows), :]
            known = code != 0                      # single compare (regr | cls)
            # MSELoss(reduction='none')
            diff = x - y
            # BCEWithLogitsLoss(reduction='none'), numerically stable:
            #   max(x,0) - x*y + log1p(exp(-|x|))
            bce = jnp.maximum(x, 0.0) - x * y + jnp.log1p(jnp.exp(-jnp.abs(x)))
            # Nested selects: garbage x/y in padded / out-of-range rows is never
            # selected because their code is 0.
            contrib = jnp.where(known, jnp.where(code == 2, bce, diff * diff), 0.0)
            return jnp.sum(contrib), jnp.sum(known.astype(jnp.float32))

        # Static chunk loop: static slice starts, only two scalars live across
        # iterations -> bounded temporaries, no dynamic packed-int8 slicing.
        s, c = chunk_sums(0)
        for kk in range(1, nchunks):
            ds_, dc = chunk_sums(kk * crows)
            s = s + ds_
            c = c + dc

        # Lane-dense (8,128) partial-result block: row 0 = loss sum, row 1 = count.
        row = jax.lax.broadcasted_iota(jnp.int32, out_ref.shape, 0)
        out_ref[...] = jnp.where(row == 0, s, jnp.where(row == 1, c, 0.0))

    return kernel


def trait_loss(inputs, pred, target, reduction="mean"):
    """inputs: (N, 3) float, pred/target: (N, 1) float. Returns scalar loss."""
    assert reduction in ("mean", "sum")
    N = inputs.shape[0]

    inputs = inputs.astype(jnp.float32)
    x = pred.astype(jnp.float32).reshape(N)
    y = target.astype(jnp.float32).reshape(N)

    # Collapse metadata to one int8 code per sample (fused XLA elementwise).
    a, b, c = inputs[:, 0], inputs[:, 1], inputs[:, 2]
    unknown = jnp.logical_and(b != 1.0, c == -1.0)   # present-but-unknown -> dropped
    code = jnp.where(unknown, 0, jnp.where(a == 10.0, 2, 1)).astype(jnp.int8)

    # Static slab geometry: `rows` data rows of COLS samples each.
    rows = (N + COLS - 1) // COLS
    if rows > MAX_BR:
        br = MAX_BR
    else:
        # Split into >=2 blocks when big enough so both v7x TensorCores get work;
        # otherwise one full-array block (legal for any row count).
        half = (rows // 2) // 32 * 32
        br = half if half >= 64 else rows
    grid = (rows + br - 1) // br

    # pred/target: pad only up to the next multiple of COLS (no pad when
    # N % COLS == 0 -- reshape is free). The last row-block may be partial; its
    # out-of-range rows contribute nothing because `code` reads 0 there.
    pad_xy = rows * COLS - N
    if pad_xy:
        x = jnp.pad(x, (0, pad_xy))
        y = jnp.pad(y, (0, pad_xy))
    x_p = x.reshape(rows, COLS)
    y_p = y.reshape(rows, COLS)
    # code: pad to the full block grid so every row any block can see is 0=dropped.
    code_p = jnp.pad(code, (0, grid * br * COLS - N)).reshape(grid * br, COLS)

    partials = pl.pallas_call(
        _make_kernel(br),
        out_shape=jax.ShapeDtypeStruct((grid * 8, 128), jnp.float32),
        grid_spec=pltpu.PrefetchScalarGridSpec(
            num_scalar_prefetch=0,
            grid=(grid,),
            in_specs=[
                pl.BlockSpec((br, COLS), lambda j: (j, 0)),   # int8 code
                pl.BlockSpec((br, COLS), lambda j: (j, 0)),   # f32 pred
                pl.BlockSpec((br, COLS), lambda j: (j, 0)),   # f32 target
            ],
            out_specs=pl.BlockSpec((8, 128), lambda j: (j, 0)),
        ),
        compiler_params=pltpu.CompilerParams(
            dimension_semantics=("parallel",),
            vmem_limit_bytes=32 * 1024 * 1024,   # safe on v5e/v6e/v7x; covers br=1024
        ),
    )(code_p, x_p, y_p)

    part = partials.reshape(grid, 8, 128)
    total = jnp.sum(part[:, 0, 0])
    cnt = jnp.sum(part[:, 1, 0])
    if reduction == "mean":
        # Matches PyTorch: mean over an empty selection -> NaN (cnt == 0).
        return total / cnt
    return total


def trait_loss_ref(inputs, pred, target, reduction="mean"):
    """Pure-JAX reference mirroring the PyTorch forward (weight=None)."""
    a, b, c = inputs[:, 0], inputs[:, 1], inputs[:, 2]
    unknown = (b != 1.0) & (c == -1.0)
    known = ~unknown
    regr = known & (a != 10.0)
    cls = known & (a == 10.0)
    x, y = pred[:, 0], target[:, 0]
    mse = (x - y) ** 2
    bce = jnp.maximum(x, 0.0) - x * y + jnp.log1p(jnp.exp(-jnp.abs(x)))
    total = jnp.sum(jnp.where(regr, mse, 0.0) + jnp.where(cls, bce, 0.0))
    cnt = jnp.sum(known.astype(jnp.float32))
    return total / cnt if reduction == "mean" else total


if __name__ == "__main__":
    key = jax.random.PRNGKey(0)

    def make_case(k, N):
        k0, k1, k2, k3, k4, k5 = jax.random.split(k, 6)
        col0 = jax.random.randint(k0, (N,), 0, 12).astype(jnp.float32)   # some == 10 (class traits)
        col1 = jnp.where(jax.random.bernoulli(k1, 0.5, (N,)), 1.0, -1.0)
        col2 = jnp.where(jax.random.bernoulli(k3, 0.3, (N,)), -1.0, jax.random.normal(k2, (N,)))
        inputs = jnp.stack([col0, col1, col2], axis=1)                    # (N, 3)
        pred = jax.random.normal(k4, (N, 1), jnp.float32)                 # (N, 1)
        target = jax.random.normal(k5, (N, 1), jnp.float32)               # (N, 1)
        return inputs, pred, target

    ka, kb = jax.random.split(key)
    # Small case (batch=2, n_traits=60 -> N=120): single (1, 512) block, padding path.
    # Larger case: grid=2 "parallel" blocks, in-kernel chunk loop, partial last block.
    cases = [(make_case(ka, 2 * 60), 1e-5), (make_case(kb, 1024 * 512 + 777), 5e-4)]

    for (inputs, pred, target), rtol in cases:
        for red in ("mean", "sum"):
            loss = jax.block_until_ready(trait_loss(inputs, pred, target, reduction=red))
            ref = trait_loss_ref(inputs, pred, target, reduction=red)
            assert jnp.allclose(loss, ref, rtol=rtol, atol=1e-5), (red, loss, ref)
    print("KERNEL_OK")
</pallas_src>

<mosaic_0001>
module attributes {stable_mosaic.version = 11 : i64} {
  func.func @kernel(%arg0: i32, %arg1: memref<1x512xi8, #tpu.memory_space<vmem>>, %arg2: memref<1x512xf32, #tpu.memory_space<vmem>>, %arg3: memref<1x512xf32, #tpu.memory_space<vmem>>, %arg4: memref<8x128xf32, #tpu.memory_space<vmem>>) attributes {dimension_semantics = [#tpu.dimension_semantics<parallel>], iteration_bounds = array<i64: 1>, scalar_prefetch = 0 : i64, scratch_operands = 0 : i64, tpu.core_type = #tpu.core_type<tc>, window_params = [{transform_indices = @transform_0, window_bounds = array<i64: 1, 512>}, {transform_indices = @transform_1, window_bounds = array<i64: 1, 512>}, {transform_indices = @transform_2, window_bounds = array<i64: 1, 512>}, {transform_indices = @transform_3, window_bounds = array<i64: 8, 128>}]} {
    %c0 = arith.constant 0 : index
    %c0_0 = arith.constant 0 : index
    %0 = vector.load %arg1[%c0, %c0_0] : memref<1x512xi8, #tpu.memory_space<vmem>>, vector<1x512xi8>
    %1 = arith.extsi %0 : vector<1x512xi8> to vector<1x512xi32>
    %c0_1 = arith.constant 0 : index
    %c0_2 = arith.constant 0 : index
    %2 = vector.load %arg2[%c0_1, %c0_2] : memref<1x512xf32, #tpu.memory_space<vmem>>, vector<1x512xf32>
    %c0_3 = arith.constant 0 : index
    %c0_4 = arith.constant 0 : index
    %3 = vector.load %arg3[%c0_3, %c0_4] : memref<1x512xf32, #tpu.memory_space<vmem>>, vector<1x512xf32>
    %c0_i32 = arith.constant 0 : i32
    %4 = vector.broadcast %c0_i32 : i32 to vector<1x512xi32>
    %5 = arith.cmpi ne, %1, %4 : vector<1x512xi32>
    %6 = arith.subf %2, %3 : vector<1x512xf32>
    %cst = arith.constant 0.000000e+00 : f32
    %7 = vector.broadcast %cst : f32 to vector<1x512xf32>
    %8 = arith.maximumf %2, %7 : vector<1x512xf32>
    %9 = arith.mulf %2, %3 : vector<1x512xf32>
    %10 = arith.subf %8, %9 : vector<1x512xf32>
    %11 = math.absf %2 : vector<1x512xf32>
    %cst_5 = arith.constant 0.000000e+00 : f32
    %12 = vector.broadcast %cst_5 : f32 to vector<1x512xf32>
    %13 = arith.subf %12, %11 : vector<1x512xf32>
    %14 = math.exp %13 : vector<1x512xf32>
    %15 = math.log1p %14 : vector<1x512xf32>
    %16 = arith.addf %10, %15 : vector<1x512xf32>
    %c2_i32 = arith.constant 2 : i32
    %17 = vector.broadcast %c2_i32 : i32 to vector<1x512xi32>
    %18 = arith.cmpi eq, %1, %17 : vector<1x512xi32>
    %19 = arith.mulf %6, %6 : vector<1x512xf32>
    %20 = arith.select %18, %16, %19 : vector<1x512xi1>, vector<1x512xf32>
    %cst_6 = arith.constant 0.000000e+00 : f32
    %21 = vector.broadcast %cst_6 : f32 to vector<1x512xf32>
    %22 = arith.select %5, %20, %21 : vector<1x512xi1>, vector<1x512xf32>
    %23 = vector.shape_cast %22 : vector<1x512xf32> to vector<1x1x512xf32>
    %cst_7 = arith.constant dense<0.000000e+00> : vector<1xf32>
    %24 = vector.multi_reduction <add>, %23, %cst_7 [1, 2] : vector<1x1x512xf32> to vector<1xf32>
    %25 = vector.shape_cast %24 : vector<1xf32> to vector<1x1x1xf32>
    %26 = vector.extract %25[0, 0, 0] : f32 from vector<1x1x1xf32>
    %27 = arith.extui %5 : vector<1x512xi1> to vector<1x512xi32>
    %28 = arith.sitofp %27 : vector<1x512xi32> to vector<1x512xf32>
    %29 = vector.shape_cast %28 : vector<1x512xf32> to vector<1x1x512xf32>
    %cst_8 = arith.constant dense<0.000000e+00> : vector<1xf32>
    %30 = vector.multi_reduction <add>, %29, %cst_8 [1, 2] : vector<1x1x512xf32> to vector<1xf32>
    %31 = vector.shape_cast %30 : vector<1xf32> to vector<1x1x1xf32>
    %32 = vector.extract %31[0, 0, 0] : f32 from vector<1x1x1xf32>
    %33 = tpu.iota {dimensions = array<i32: 0>} : vector<8x128xi32>
    %c0_i32_9 = arith.constant 0 : i32
    %34 = vector.broadcast %c0_i32_9 : i32 to vector<8x128xi32>
    %35 = arith.cmpi eq, %33, %34 : vector<8x128xi32>
    %c1_i32 = arith.constant 1 : i32
    %36 = vector.broadcast %c1_i32 : i32 to vector<8x128xi32>
    %37 = arith.cmpi eq, %33, %36 : vector<8x128xi32>
    %cst_10 = arith.constant 0.000000e+00 : f32
    %38 = vector.broadcast %32 : f32 to vector<8x128xf32>
    %39 = vector.broadcast %cst_10 : f32 to vector<8x128xf32>
    %40 = arith.select %37, %38, %39 : vector<8x128xi1>, vector<8x128xf32>
    %41 = vector.broadcast %26 : f32 to vector<8x128xf32>
    %42 = arith.select %35, %41, %40 : vector<8x128xi1>, vector<8x128xf32>
    %c0_11 = arith.constant 0 : index
    %c0_12 = arith.constant 0 : index
    %43 = vector.load %arg4[%c0_11, %c0_12] : memref<8x128xf32, #tpu.memory_space<vmem>>, vector<8x128xf32>
    tpu.vector_store %arg4[%c0_11, %c0_12], %42 {strides = array<i32>} : memref<8x128xf32, #tpu.memory_space<vmem>>, vector<8x128xf32>,
    return
  }
  func.func @transform_0(%arg0: i32) -> (i32, i32) {
    %c0_i32 = arith.constant 0 : i32
    %c0_i32_0 = arith.constant 0 : i32
    return %arg0, %c0_i32 : i32, i32
  }
  func.func @transform_1(%arg0: i32) -> (i32, i32) {
    %c0_i32 = arith.constant 0 : i32
    %c0_i32_0 = arith.constant 0 : i32
    return %arg0, %c0_i32 : i32, i32
  }
  func.func @transform_2(%arg0: i32) -> (i32, i32) {
    %c0_i32 = arith.constant 0 : i32
    %c0_i32_0 = arith.constant 0 : i32
    return %arg0, %c0_i32 : i32, i32
  }
  func.func @transform_3(%arg0: i32) -> (i32, i32) {
    %c0_i32 = arith.constant 0 : i32
    %c0_i32_0 = arith.constant 0 : i32
    return %arg0, %c0_i32 : i32, i32
  }
}

</mosaic_0001>

<llo_original>
// kernel: tpu_custom_call.1
$region0: #{tpu_custom_call.1}
  #allocation0 [shape = 'u32[]', space=smem, size = 0x4, offset = 0x4, fixed_abs, tag = 'smem constant byte address 0x4 - core index']
  #allocation1 [shape = 'u32[144,128]{1,0:T(1,128)}', space=vmem, size = 0x12000, scoped, tag = 'internal scratch']
  %s0 = inlined_call_operand.hbm [shape: s8[1,512], index: 0, kind: input, shape index: {}]
  %s1 = inlined_call_operand.hbm [shape: f32[1,512], index: 1, kind: input, shape index: {}]
  %s2 = inlined_call_operand.hbm [shape: f32[1,512], index: 2, kind: input, shape index: {}]
  %s3 = inlined_call_operand.hbm [shape: f32[8,128], index: 3, kind: output, shape index: {}]
  %s4 = sld [smem:[#allocation0]]
  $region34: #{tpu_custom_call.1} parent=0
    _
  %s6 = ssub.s32 1, %s4
  %s7 = scalar_select 0, %s6, %s4
  $region1: #{tpu_custom_call.1} parent=0
    #allocation2 [shape = 'u8[2048]{0}', space=vmem, size = 0x800, scoped, tag = 'input window, operand 0, single buffered']
    #allocation3 [shape = 's32[1]{0}', space=sflag, size = 0x4, scoped, tag = 'scoped memory for tpu_custom_call.1']
    #allocation4 [shape = 's32[1]{0}', space=sflag, size = 0x4, scoped, tag = 'scoped memory for tpu_custom_call.1']
    #allocation5 [shape = 'u8[2048]{0}', space=vmem, size = 0x800, scoped, tag = 'input window, operand 1, single buffered']
    #allocation6 [shape = 's32[1]{0}', space=sflag, size = 0x4, scoped, tag = 'scoped memory for tpu_custom_call.1']
    #allocation7 [shape = 'u8[2048]{0}', space=vmem, size = 0x800, scoped, tag = 'input window, operand 2, single buffered']
    #allocation8 [shape = 'u8[4096]{0}', space=vmem, size = 0x1000, scoped, tag = 'output window, operand 0, single buffered']
    %8 = vsyncpa [#allocation3], 0
    %9 = vsyncpa [#allocation6], 0
    %10 = vsyncpa [#allocation4], 0
    // Predicated region
    $region2: #{tpu_custom_call.1} parent=1 // pred_check
      _
    $region3: #{tpu_custom_call.1} parent=1 // pred_check_branch
      %12 = sbr.rel (0) target = $region5
    $region4: #{tpu_custom_call.1} parent=1 // pred_region
      %s14 = ssub.s32 64, 64
      %15 = vsyncadd [#allocation3], %s14
      %s17 = sshll.u32 [#allocation2], 4
      %s18 = int_to_ptr.vmem [resolvable:$true] %s17
      %20 = dma.hbm_to_vmem [thread:$0]  %s0, 64, %s18, [#allocation3]
    $region5: #{tpu_custom_call.1} parent=1 // pred_fallthru
      _
    // Predicated region
    $region6: #{tpu_custom_call.1} parent=1 // pred_check
      _
    $region7: #{tpu_custom_call.1} parent=1 // pred_check_branch
      %22 = sbr.rel (0) target = $region9
    $region8: #{tpu_custom_call.1} parent=1 // pred_region
      %s24 = ssub.s32 64, 64
      %25 = vsyncadd [#allocation6], %s24
      %s27 = sshll.u32 [#allocation5], 4
      %s28 = int_to_ptr.vmem [resolvable:$true] %s27
      %30 = dma.hbm_to_vmem [thread:$0]  %s1, 64, %s28, [#allocation6]
    $region9: #{tpu_custom_call.1} parent=1 // pred_fallthru
      _
    // Predicated region
    $region10: #{tpu_custom_call.1} parent=1 // pred_check
      _
    $region11: #{tpu_custom_call.1} parent=1 // pred_check_branch
      %32 = sbr.rel (0) target = $region13
    $region12: #{tpu_custom_call.1} parent=1 // pred_region
      %s34 = ssub.s32 64, 64
      %35 = vsyncadd [#allocation6], %s34
      %s37 = sshll.u32 [#allocation7], 4
      %s38 = int_to_ptr.vmem [resolvable:$true] %s37
      %40 = dma.hbm_to_vmem [thread:$0]  %s2, 64, %s38, [#allocation6]
    $region13: #{tpu_custom_call.1} parent=1 // pred_fallthru
      _
    // Predicated region
    $region14: #{tpu_custom_call.1} parent=1 // pred_check
      _
    $region15: #{tpu_custom_call.1} parent=1 // pred_check_branch
      %42 = sbr.rel (0) target = $region17
    $region16: #{tpu_custom_call.1} parent=1 // pred_region
      %43 = dma.done [#allocation3], 64
    $region17: #{tpu_custom_call.1} parent=1 // pred_fallthru
      _
    // Predicated region
    $region18: #{tpu_custom_call.1} parent=1 // pred_check
      _
    $region19: #{tpu_custom_call.1} parent=1 // pred_check_branch
      %45 = sbr.rel (0) target = $region21
    $region20: #{tpu_custom_call.1} parent=1 // pred_region
      %46 = dma.done [#allocation6], 64
    $region21: #{tpu_custom_call.1} parent=1 // pred_fallthru
      _
    // Predicated region
    $region22: #{tpu_custom_call.1} parent=1 // pred_check
      _
    $region23: #{tpu_custom_call.1} parent=1 // pred_check_branch
      %48 = sbr.rel (0) target = $region25
    $region24: #{tpu_custom_call.1} parent=1 // pred_region
      %49 = dma.done [#allocation6], 64
    $region25: #{tpu_custom_call.1} parent=1 // pred_fallthru
      _
    %v50 = vld [vmem:[#allocation2] sm:$0xf]
    %v51 = vunpack.c.0.s8 %v50
    %v52 = vunpack.c.1.s8 %v50
    %v53 = vld [vmem:[#allocation5] sm:$0xf]
    %v54 = vld [vmem:[#allocation7] sm:$0xf]
    %vm55 = vcmp.ne.s32.totalorder %v51, 0
    %vm56 = vcmp.ne.s32.totalorder %v52, 0
    %v57 = vsub.f32 %v53, %v54
    %v58 = vmax.f32 %v53, 0.0
    %v59 = vmul.f32 %v53, %v54
    %v60 = vsub.f32 %v58, %v59
    %v61 = vand.u32 2147483647, %v53
    %v62 = vsub.f32 0.0, %v61
    %v63 = vmul.f32 %v62, 1.442695
    %v64 = vpow.pop %v63
    %v65 = vadd.f32 %v64, 1.0
    %v66 = vlog2.pop %v65
    %v67 = vmul.f32 %v66, 0.6931472
    %v68 = vmul.f32 -0.5, %v64
    %v69 = vadd.f32 %v68, 1.0
    %v70 = vmul.f32 %v69, %v64
    %v71 = vand.u32 2147483647, %v64
    %vm72 = vcmp.lt.f32.partialorder %v71, 0.0004427343
    %v73 = vsel %vm72, %v70, %v67
    %v74 = vadd.f32 %v60, %v73
    %vm75 = vcmp.eq.s32.totalorder %v51, 2
    %vm76 = vcmp.eq.s32.totalorder %v52, 2
    %v77 = vmul.f32 %v57, %v57
    %v80 = vunpack.c.l.s4 286326784
    %v81 = vunpack.c.0.s8 %v80
    %v82 = vlaneseq
    %v83 = vshrl.u32 %v82, 7
    %v84 = vsub.s32 %v81, %v83
    %v85 = vrot.slane %v74, %v84
    %v87 = vunpack.c.l.s4 858989090
    %v88 = vunpack.c.0.s8 %v87
    %v89 = vlaneseq
    %v90 = vshrl.u32 %v89, 7
    %v91 = vsub.s32 %v88, %v90
    %v92 = vrot.slane %v74, %v91
    %v97 = vunpack.c.l.s4 286326784
    %v98 = vunpack.c.0.s8 %v97
    %v99 = vlaneseq
    %v100 = vshrl.u32 %v99, 7
    %v101 = vsub.s32 %v98, %v100
    %v102 = vrot.slane %v77, %v101
    %v104 = vunpack.c.l.s4 858989090
    %v105 = vunpack.c.0.s8 %v104
    %v106 = vlaneseq
    %v107 = vshrl.u32 %v106, 7
    %v108 = vsub.s32 %v105, %v107
    %v109 = vrot.slane %v77, %v108
    %v112 = vsel %vm75, %v85, %v102
    %v113 = vsel %vm76, %v92, %v109
    %v114 = vsel %vm55, %v112, 0.0
    %v115 = vsel %vm56, %v113, 0.0
    %v118 = vlaneseq
    %v119 = vshrl.u32 %v118, 7
    %v120 = vsub.s32 0, %v119
    %v121 = vrot.slane %v114, %v120
    %v122 = vlaneseq
    %v123 = vshrl.u32 %v122, 7
    %v124 = vsub.s32 4, %v123
    %v125 = vrot.slane %v114, %v124
    %v126 = vlaneseq
    %v127 = vshrl.u32 %v126, 7
    %v128 = vsub.s32 0, %v127
    %v129 = vrot.slane %v115, %v128
    %v130 = vlaneseq
    %v131 = vshrl.u32 %v130, 7
    %v132 = vsub.s32 4, %v131
    %v133 = vrot.slane %v115, %v132
    %vm138 = vcmask 1040384
    %v139 = vsel %vm138, %v121, 0.0
    %v140 = vsel %vm138, %v125, 0.0
    %v141 = vadd.f32 %v139, %v140
    %v142 = vsel %vm138, %v129, 0.0
    %v143 = vadd.f32 %v141, %v142
    %v144 = vsel %vm138, %v133, 0.0
    %v145 = vadd.f32 %v143, %v144
    %146 = vadd.xlane.f32.xlu0 %v145
    %v147 = vpop.xlane.xlu0 %146
    %v148 = vrot.slane %v147, 4
    %v149 = vadd.f32 %v147, %v148
    %v150 = vrot.slane %v149, 2
    %v151 = vadd.f32 %v149, %v150
    %v152 = vrot.slane %v151, 1
    %v153 = vadd.f32 %v151, %v152
    %s154 = vtos %v153
    %v155 = vsel %vm55, 1, 0
    %v156 = vsel %vm56, 1, 0
    %v157 = vcvt.s32.f32 %v155
    %v158 = vcvt.s32.f32 %v156
    %v161 = vlaneseq
    %v162 = vshrl.u32 %v161, 7
    %v163 = vsub.s32 0, %v162
    %v164 = vrot.slane %v157, %v163
    %v165 = vlaneseq
    %v166 = vshrl.u32 %v165, 7
    %v167 = vsub.s32 4, %v166
    %v168 = vrot.slane %v157, %v167
    %v169 = vlaneseq
    %v170 = vshrl.u32 %v169, 7
    %v171 = vsub.s32 0, %v170
    %v172 = vrot.slane %v158, %v171
    %v173 = vlaneseq
    %v174 = vshrl.u32 %v173, 7
    %v175 = vsub.s32 4, %v174
    %v176 = vrot.slane %v158, %v175
    %v181 = vsel %vm138, %v164, 0.0
    %v182 = vsel %vm138, %v168, 0.0
    %v183 = vadd.f32 %v181, %v182
    %v184 = vsel %vm138, %v172, 0.0
    %v185 = vadd.f32 %v183, %v184
    %v186 = vsel %vm138, %v176, 0.0
    %v187 = vadd.f32 %v185, %v186
    %188 = vadd.xlane.f32.xlu0 %v187
    %v189 = vpop.xlane.xlu0 %188
    %v190 = vrot.slane %v189, 4
    %v191 = vadd.f32 %v189, %v190
    %v192 = vrot.slane %v191, 2
    %v193 = vadd.f32 %v191, %v192
    %v194 = vrot.slane %v193, 1
    %v195 = vadd.f32 %v193, %v194
    %s196 = vtos %v195
    %v197 = vlaneseq
    %v198 = vshrl.u32 %v197, 7
    %vm199 = vcmp.eq.s32.totalorder %v198, 0
    %vm200 = vcmp.eq.s32.totalorder %v198, 1
    %v201 = vstv %s196
    %v202 = vsel %vm200, %v201, 0.0
    %v203 = vstv %s154
    %v204 = vsel %vm199, %v203, %v202
    %205 = vst [vmem:[#allocation8] sm:$0xff] %v204
    // Predicated region
    $region26: #{tpu_custom_call.1} parent=1 // pred_check
      _
    $region27: #{tpu_custom_call.1} parent=1 // pred_check_branch
      %207 = sbr.rel (0) target = $region29
    $region28: #{tpu_custom_call.1} parent=1 // pred_region
      %s209 = ssub.s32 128, 128
      %210 = vsyncadd [#allocation4], %s209
      %s212 = sshll.u32 [#allocation8], 4
      %s213 = int_to_ptr.vmem [resolvable:$true] %s212
      %215 = dma.vmem_to_hbm [thread:$0]  %s213, 128, %s3, [#allocation4]
    $region29: #{tpu_custom_call.1} parent=1 // pred_fallthru
      _
    // Predicated region
    $region30: #{tpu_custom_call.1} parent=1 // pred_check
      _
    $region31: #{tpu_custom_call.1} parent=1 // pred_check_branch
      %217 = sbr.rel (0) target = $region33
    $region32: #{tpu_custom_call.1} parent=1 // pred_region
      %218 = dma.done [#allocation4], 128
    $region33: #{tpu_custom_call.1} parent=1 // pred_fallthru
      _
    %219 = vsyncpa [#allocation3], 1
    %220 = vsyncpa [#allocation6], 1
    %221 = vsyncpa [#allocation4], 1

</llo_original>
